<compile_context>
chip_gen: v7x
topology: tpu7x:2x2x1
jax: 0.10.0
libtpu: 0.0.40
codegen_flags: <defaults>
</compile_context>

<pallas_src>
import math
import functools

import jax
import jax.numpy as jnp
from jax import lax
from jax.experimental import pallas as pl
from jax.experimental.pallas import tpu as pltpu


_VMEM_TARGET_BYTES = 40 * 1024 * 1024   # per-step working-set target (v7x has 64 MiB VMEM)
_VMEM_LIMIT_CAP = 64 * 1024 * 1024      # safe scoped-VMEM ceiling on all generations


def _vmem_step_bytes(bb, n, dim_in, dim_v, num_heads, key_tile, x_bytes, out_bytes, w_bytes):
    """Rough per-grid-step VMEM working-set estimate in bytes."""
    f32 = 4
    dh = dim_v // num_heads
    xio = 2 * bb * n * dim_in * x_bytes                     # double-buffered X input block
    oio = 2 * bb * n * dim_v * out_bytes                    # double-buffered output block
    wts = 2 * (dim_in * 3 * dim_v + dim_v * dim_v) * w_bytes + 2 * 4 * dim_v * f32  # weights + biases
    qkv = bb * n * 3 * dim_v * f32                          # f32 projection slab
    cst = bb * n * 3 * dim_v * w_bytes                      # scaled-Q + K|V copies at MXU dtype
    scr = 3 * bb * n * key_tile * f32                       # live score temporaries (s, p, ...)
    hed = 3 * bb * n * dh * f32                             # per-head acc / av / residual temps
    acc = bb * n * dim_v * f32                              # head-assembly scratch slab
    ffn = 2 * bb * n * dim_v * f32                          # ff / out temporaries
    return int(1.15 * (xio + oio + wts + qkv + cst + scr + hed + acc + ffn))


def _choose_block_b(batch, n, dim_in, dim_v, num_heads, key_tile,
                    x_bytes, out_bytes, w_bytes, budget=_VMEM_TARGET_BYTES, max_bb=8):
    """Largest batch block that fits the VMEM budget, preferring a >=2 (even) grid for v7x."""
    cands = [d for d in range(1, min(batch, max_bb) + 1) if batch % d == 0]
    fits = [d for d in cands
            if _vmem_step_bytes(d, n, dim_in, dim_v, num_heads, key_tile,
                                x_bytes, out_bytes, w_bytes) <= budget]
    if not fits:
        fits = [1]
    # v7x has 2 TensorCores: prefer >= 2 (ideally even) grid steps so the "parallel" axis
    # can shard across both; on v5e/v6e an extra step costs only ~0.35us.
    pref = [d for d in fits if batch // d >= 2 and (batch // d) % 2 == 0]
    if not pref:
        pref = [d for d in fits if batch // d >= 2]
    if not pref:
        pref = fits
    return max(pref)


def sab_kernel(x_ref, wqkv_ref, bqkv_ref, wo_ref, bo_ref, o_ref, acc_ref,
               *, num_heads, dim_V, key_tile, mxu_dtype):
    Bb, N, dim_in = x_ref.shape
    dh = dim_V // num_heads
    n_kt = N // key_tile
    scale = 1.0 / math.sqrt(dim_V)  # NOTE: PyTorch MAB scales by sqrt(dim_V), not sqrt(head_dim)

    # --- fused Q/K/V projection: one matmul over the whole (Bb*N, dim_in) slab ---
    # (wqkv is already in the MXU dtype -- pre-cast in the wrapper, no per-step re-cast.)
    x = x_ref[...].reshape(Bb * N, dim_in).astype(mxu_dtype)
    qkv = jnp.dot(x, wqkv_ref[...], preferred_element_type=jnp.float32) + bqkv_ref[...]

    q = qkv[:, :dim_V]                              # f32, kept for the residual
    # Fold 1/sqrt(dim_V) into Q once (Bb*N*dim_V muls) instead of scaling every (N, Tk)
    # score tile; single contiguous casts of scaled-Q and K|V to the MXU dtype.
    q_s = (q * scale).astype(mxu_dtype)
    kv = qkv[:, dim_V:].astype(mxu_dtype)           # (Bb*N, 2*dim_V) = K | V

    for h in range(num_heads):
        sl = slice(h * dh, (h + 1) * dh)
        qh = q_s[:, sl].reshape(Bb, N, dh)                                  # scaled, MXU dtype
        kh = kv[:, h * dh:(h + 1) * dh].reshape(Bb, N, dh)
        vh = kv[:, dim_V + h * dh:dim_V + (h + 1) * dh].reshape(Bb, N, dh)

        def scores(kt, qh=qh, kh=kh):
            ks = kh[:, kt * key_tile:(kt + 1) * key_tile, :]
            # contraction on last dims, batched over Bb -- no explicit transpose
            return lax.dot_general(qh, ks,
                                   dimension_numbers=(((2,), (2,)), ((0,), (0,))),
                                   preferred_element_type=jnp.float32)

        def pv(p, kt, vh=vh):
            vs = vh[:, kt * key_tile:(kt + 1) * key_tile, :]
            return lax.dot_general(p.astype(mxu_dtype), vs,
                                   dimension_numbers=(((2,), (1,)), ((0,), (0,))),
                                   preferred_element_type=jnp.float32)

        # Flash-style key-axis tiling with online softmax: only a (Bb, N, key_tile) score
        # tile is live at a time. With key_tile == N this is plain numerically-stable softmax.
        s = scores(0)
        m = jnp.max(s, axis=-1, keepdims=True)
        p = jnp.exp(s - m)
        l = jnp.sum(p, axis=-1, keepdims=True)
        acc = pv(p, 0)
        for kt in range(1, n_kt):
            s = scores(kt)
            m_new = jnp.maximum(m, jnp.max(s, axis=-1, keepdims=True))
            alpha = jnp.exp(m - m_new)
            p = jnp.exp(s - m_new)
            l = alpha * l + jnp.sum(p, axis=-1, keepdims=True)
            acc = alpha * acc + pv(p, kt)
            m = m_new

        av = acc * pl.reciprocal(l, approx=True)        # EUP reciprocal (VALU-free)
        # Per-head residual written straight into the VMEM scratch slab (no concatenate).
        # TODO(synk): when head_dim < 128 these are masked lane-slice stores; batching heads
        # into one dot_general (head as a batch dim) needs a sublane<->major relayout that
        # Mosaic does not lower reliably, so the per-head loop is kept.
        acc_ref[:, :, sl] = q[:, sl].reshape(Bb, N, dh) + av

    # --- output FFN + residual, again one matmul over the whole slab ---
    o = acc_ref[...].reshape(Bb * N, dim_V)
    ff = jnp.dot(o.astype(mxu_dtype), wo_ref[...], preferred_element_type=jnp.float32) + bo_ref[...]
    out = o + jnp.maximum(ff, 0.0)

    # TODO(synk): ln=True branch (LayerNorm ln0/ln1) not implemented; module default is ln=False.
    o_ref[...] = out.reshape(Bb, N, dim_V).astype(o_ref.dtype)


def sab_forward(x, params, num_heads, *, block_b=None, key_block=512,
                mxu_dtype=jnp.bfloat16, out_dtype=None):
    B, N, dim_in = x.shape
    dim_V = params["wq"].shape[1]
    assert dim_V % num_heads == 0, "dim_V must be divisible by num_heads"
    # Bandwidth-limited chips (v5e): pass bf16 x and/or out_dtype=bf16 to halve I/O bytes.
    out_dtype = x.dtype if out_dtype is None else out_dtype

    # Key-axis tile for flash-style attention; tiling enabled only when it divides N cleanly.
    if key_block is not None and N > key_block and N % key_block == 0 and key_block % 8 == 0:
        key_tile = key_block
    else:
        key_tile = N

    # Stack Q/K/V projection weights (single projection matmul) and pre-cast the big weight
    # matrices to the MXU dtype in the wrapper: halves their HBM/VMEM footprint and removes
    # the redundant per-grid-step cast. Biases stay f32 (added to the f32 accumulator).
    wqkv = jnp.concatenate([params["wq"], params["wk"], params["wv"]], axis=1).astype(mxu_dtype)
    bqkv = jnp.concatenate([params["bq"], params["bk"], params["bv"]], axis=1).astype(jnp.float32)
    wo = params["wo"].astype(mxu_dtype)
    bo = params["bo"].astype(jnp.float32)

    x_bytes = jnp.dtype(x.dtype).itemsize
    out_bytes = jnp.dtype(out_dtype).itemsize
    w_bytes = jnp.dtype(mxu_dtype).itemsize

    if block_b is None:
        block_b = _choose_block_b(B, N, dim_in, dim_V, num_heads, key_tile,
                                  x_bytes, out_bytes, w_bytes)
    Bb = block_b
    assert B % Bb == 0

    est = _vmem_step_bytes(Bb, N, dim_in, dim_V, num_heads, key_tile,
                           x_bytes, out_bytes, w_bytes)
    vmem_limit = int(min(_VMEM_LIMIT_CAP, max(32 * 1024 * 1024, est + 8 * 1024 * 1024)))

    kernel = functools.partial(sab_kernel, num_heads=num_heads, dim_V=dim_V,
                               key_tile=key_tile, mxu_dtype=mxu_dtype)

    def const_spec(shape):
        # Constant index_map -> same weight block every step.
        # TODO(synk): pipeline_mode=pl.Buffered(1) would reclaim the pointless second buffer
        # of these constant blocks once reliably supported by the pallas_call lowering.
        return pl.BlockSpec(shape, lambda b: (0,) * len(shape))

    return pl.pallas_call(
        kernel,
        out_shape=jax.ShapeDtypeStruct((B, N, dim_V), out_dtype),
        grid=(B // Bb,),
        in_specs=[
            pl.BlockSpec((Bb, N, dim_in), lambda b: (b, 0, 0)),   # X batch-block
            const_spec((dim_in, 3 * dim_V)), const_spec((1, 3 * dim_V)),   # fused fc_q|fc_k|fc_v
            const_spec((dim_V, dim_V)), const_spec((1, dim_V)),            # fc_o
        ],
        out_specs=pl.BlockSpec((Bb, N, dim_V), lambda b: (b, 0, 0)),
        scratch_shapes=[pltpu.VMEM((Bb, N, dim_V), jnp.float32)],  # per-block head-output slab
        compiler_params=pltpu.CompilerParams(
            dimension_semantics=("parallel",),
            vmem_limit_bytes=vmem_limit,
        ),
    )(x, wqkv, bqkv, wo, bo)


def sab_reference(x, params, num_heads):
    """Plain-JAX (f32) replica of the PyTorch MAB.forward(X, X) semantics."""
    dim_V = params["wq"].shape[1]
    q = x @ params["wq"] + params["bq"][0]
    k = x @ params["wk"] + params["bk"][0]
    v = x @ params["wv"] + params["bv"][0]
    dh = dim_V // num_heads
    outs = []
    for h in range(num_heads):
        sl = slice(h * dh, (h + 1) * dh)
        qh, kh, vh = q[..., sl], k[..., sl], v[..., sl]
        s = jnp.einsum("bnd,bmd->bnm", qh, kh) / math.sqrt(dim_V)
        a = jax.nn.softmax(s, axis=-1)
        outs.append(qh + jnp.einsum("bnm,bmd->bnd", a, vh))
    o = jnp.concatenate(outs, axis=-1)
    ff = o @ params["wo"] + params["bo"][0]
    return o + jnp.maximum(ff, 0.0)


def init_params(key, dim_in, dim_V):
    ks = jax.random.split(key, 8)
    s_in = 1.0 / math.sqrt(dim_in)
    s_v = 1.0 / math.sqrt(dim_V)
    return {
        "wq": jax.random.uniform(ks[0], (dim_in, dim_V), jnp.float32, -s_in, s_in),
        "bq": jax.random.uniform(ks[1], (1, dim_V), jnp.float32, -s_in, s_in),
        "wk": jax.random.uniform(ks[2], (dim_in, dim_V), jnp.float32, -s_in, s_in),
        "bk": jax.random.uniform(ks[3], (1, dim_V), jnp.float32, -s_in, s_in),
        "wv": jax.random.uniform(ks[4], (dim_in, dim_V), jnp.float32, -s_in, s_in),
        "bv": jax.random.uniform(ks[5], (1, dim_V), jnp.float32, -s_in, s_in),
        "wo": jax.random.uniform(ks[6], (dim_V, dim_V), jnp.float32, -s_v, s_v),
        "bo": jax.random.uniform(ks[7], (1, dim_V), jnp.float32, -s_v, s_v),
    }


if __name__ == "__main__":
    key = jax.random.PRNGKey(0)
    k_x, k_p, k_x2, k_p2 = jax.random.split(key, 4)

    # --- small config (matches the module defaults) ---
    B, N, dim_in, dim_out, num_heads = 2, 8, 16, 32, 4
    x = jax.random.normal(k_x, (B, N, dim_in), dtype=jnp.float32)
    params = init_params(k_p, dim_in, dim_out)
    ref = sab_reference(x, params, num_heads)

    # Default (perf) path: bf16 at the MXU, f32 accumulation / elementwise.
    out = jax.block_until_ready(sab_forward(x, params, num_heads))
    assert out.shape == (B, N, dim_out)
    assert jnp.allclose(out, ref, rtol=5e-2, atol=5e-2), "bf16-MXU output mismatch vs reference"

    # f32-MXU path for a tighter numerical check (only approx-reciprocal error remains).
    out_f32 = jax.block_until_ready(sab_forward(x, params, num_heads, mxu_dtype=jnp.float32))
    assert jnp.allclose(out_f32, ref, rtol=2e-2, atol=2e-2), "f32 output mismatch vs reference"

    # --- larger config exercising flash-style key tiling + VMEM-derived batch blocking ---
    B2, N2, din2, dv2, h2 = 4, 256, 64, 128, 4
    x2 = jax.random.normal(k_x2, (B2, N2, din2), dtype=jnp.float32)
    params2 = init_params(k_p2, din2, dv2)
    ref2 = sab_reference(x2, params2, h2)
    out2 = jax.block_until_ready(
        sab_forward(x2, params2, h2, key_block=128, mxu_dtype=jnp.float32))
    assert out2.shape == (B2, N2, dv2)
    assert jnp.allclose(out2, ref2, rtol=2e-2, atol=2e-2), "key-tiled output mismatch vs reference"

    print("KERNEL_OK")
</pallas_src>

<mosaic_0001>
module attributes {stable_mosaic.version = 11 : i64} {
  func.func @sab_kernel(%arg0: i32, %arg1: memref<1x8x16xf32, #tpu.memory_space<vmem>>, %arg2: memref<16x96xbf16, #tpu.memory_space<vmem>>, %arg3: memref<1x96xf32, #tpu.memory_space<vmem>>, %arg4: memref<32x32xbf16, #tpu.memory_space<vmem>>, %arg5: memref<1x32xf32, #tpu.memory_space<vmem>>, %arg6: memref<1x8x32xf32, #tpu.memory_space<vmem>>, %arg7: memref<1x8x32xf32, #tpu.memory_space<vmem>>) attributes {dimension_semantics = [#tpu.dimension_semantics<parallel>], iteration_bounds = array<i64: 2>, scalar_prefetch = 0 : i64, scratch_operands = 1 : i64, tpu.core_type = #tpu.core_type<tc>, window_params = [{transform_indices = @transform_0, window_bounds = array<i64: 1, 8, 16>}, {pipeline_mode = #tpu.pipeline_mode<synchronous>, transform_indices = @transform_1, window_bounds = array<i64: 16, 96>}, {pipeline_mode = #tpu.pipeline_mode<synchronous>, transform_indices = @transform_2, window_bounds = array<i64: 1, 96>}, {pipeline_mode = #tpu.pipeline_mode<synchronous>, transform_indices = @transform_3, window_bounds = array<i64: 32, 32>}, {pipeline_mode = #tpu.pipeline_mode<synchronous>, transform_indices = @transform_4, window_bounds = array<i64: 1, 32>}, {transform_indices = @transform_5, window_bounds = array<i64: 1, 8, 32>}]} {
    %c0 = arith.constant 0 : index
    %c0_0 = arith.constant 0 : index
    %c0_1 = arith.constant 0 : index
    %0 = vector.load %arg1[%c0, %c0_0, %c0_1] : memref<1x8x16xf32, #tpu.memory_space<vmem>>, vector<1x8x16xf32>
    %1 = vector.shape_cast %0 : vector<1x8x16xf32> to vector<8x16xf32>
    %2 = arith.truncf %1 : vector<8x16xf32> to vector<8x16xbf16>
    %c0_2 = arith.constant 0 : index
    %c0_3 = arith.constant 0 : index
    %3 = vector.load %arg2[%c0_2, %c0_3] : memref<16x96xbf16, #tpu.memory_space<vmem>>, vector<16x96xbf16>
    %cst = arith.constant dense<0.000000e+00> : vector<8x96xf32>
    %4 = tpu.matmul %2, %3, %cst {dimension_numbers = #tpu.dot_dimension_numbers<[1], [0], [0], [1], [0, 0, 1, 1], [], []>} : vector<8x16xbf16>, vector<16x96xbf16>, vector<8x96xf32> -> vector<8x96xf32>
    %c0_4 = arith.constant 0 : index
    %c0_5 = arith.constant 0 : index
    %5 = vector.load %arg3[%c0_4, %c0_5] : memref<1x96xf32, #tpu.memory_space<vmem>>, vector<1x96xf32>
    %6 = vector.broadcast %5 : vector<1x96xf32> to vector<8x96xf32>
    %7 = arith.addf %4, %6 : vector<8x96xf32>
    %8 = vector.extract_strided_slice %7 {offsets = [0, 0], sizes = [8, 32], strides = [1, 1]} : vector<8x96xf32> to vector<8x32xf32>
    %cst_6 = arith.constant 0.176776692 : f32
    %9 = vector.broadcast %cst_6 : f32 to vector<8x32xf32>
    %10 = arith.mulf %8, %9 : vector<8x32xf32>
    %11 = arith.truncf %10 : vector<8x32xf32> to vector<8x32xbf16>
    %12 = vector.extract_strided_slice %7 {offsets = [0, 32], sizes = [8, 64], strides = [1, 1]} : vector<8x96xf32> to vector<8x64xf32>
    %13 = arith.truncf %12 : vector<8x64xf32> to vector<8x64xbf16>
    %14 = vector.extract_strided_slice %11 {offsets = [0, 0], sizes = [8, 8], strides = [1, 1]} : vector<8x32xbf16> to vector<8x8xbf16>
    %15 = vector.shape_cast %14 : vector<8x8xbf16> to vector<1x8x8xbf16>
    %16 = vector.extract_strided_slice %13 {offsets = [0, 0], sizes = [8, 8], strides = [1, 1]} : vector<8x64xbf16> to vector<8x8xbf16>
    %17 = vector.shape_cast %16 : vector<8x8xbf16> to vector<1x8x8xbf16>
    %18 = vector.extract_strided_slice %13 {offsets = [0, 32], sizes = [8, 8], strides = [1, 1]} : vector<8x64xbf16> to vector<8x8xbf16>
    %19 = vector.shape_cast %18 : vector<8x8xbf16> to vector<1x8x8xbf16>
    %cst_7 = arith.constant dense<0.000000e+00> : vector<1x8x8xf32>
    %20 = tpu.matmul %15, %17, %cst_7 {dimension_numbers = #tpu.dot_dimension_numbers<[2], [2], [1], [1], [0, 0, 0, 1, 1, 1], [0], [0]>} : vector<1x8x8xbf16>, vector<1x8x8xbf16>, vector<1x8x8xf32> -> vector<1x8x8xf32>
    %cst_8 = arith.constant dense<0xFF800000> : vector<1x8xf32>
    %21 = vector.multi_reduction <maximumf>, %20, %cst_8 [2] : vector<1x8x8xf32> to vector<1x8xf32>
    %22 = vector.shape_cast %21 : vector<1x8xf32> to vector<1x8x1xf32>
    %23 = vector.broadcast %22 : vector<1x8x1xf32> to vector<1x8x8xf32>
    %24 = arith.subf %20, %23 : vector<1x8x8xf32>
    %25 = math.exp %24 : vector<1x8x8xf32>
    %cst_9 = arith.constant dense<0.000000e+00> : vector<1x8xf32>
    %26 = vector.multi_reduction <add>, %25, %cst_9 [2] : vector<1x8x8xf32> to vector<1x8xf32>
    %27 = vector.shape_cast %26 : vector<1x8xf32> to vector<1x8x1xf32>
    %28 = arith.truncf %25 : vector<1x8x8xf32> to vector<1x8x8xbf16>
    %cst_10 = arith.constant dense<0.000000e+00> : vector<1x8x8xf32>
    %29 = tpu.matmul %28, %19, %cst_10 {dimension_numbers = #tpu.dot_dimension_numbers<[2], [1], [1], [2], [0, 0, 0, 1, 1, 2], [0], [0]>} : vector<1x8x8xbf16>, vector<1x8x8xbf16>, vector<1x8x8xf32> -> vector<1x8x8xf32>
    %30 = tpu.reciprocal %27 {approx = true} : vector<1x8x1xf32> -> vector<1x8x1xf32>
    %31 = vector.broadcast %30 : vector<1x8x1xf32> to vector<1x8x8xf32>
    %32 = arith.mulf %29, %31 : vector<1x8x8xf32>
    %33 = vector.extract_strided_slice %8 {offsets = [0, 0], sizes = [8, 8], strides = [1, 1]} : vector<8x32xf32> to vector<8x8xf32>
    %34 = vector.shape_cast %33 : vector<8x8xf32> to vector<1x8x8xf32>
    %35 = arith.addf %34, %32 : vector<1x8x8xf32>
    %c0_11 = arith.constant 0 : index
    %c0_12 = arith.constant 0 : index
    %c0_13 = arith.constant 0 : index
    %36 = vector.load %arg7[%c0_11, %c0_12, %c0_13] : memref<1x8x32xf32, #tpu.memory_space<vmem>>, vector<1x8x8xf32>
    tpu.vector_store %arg7[%c0_11, %c0_12, %c0_13], %35 {strides = array<i32>} : memref<1x8x32xf32, #tpu.memory_space<vmem>>, vector<1x8x8xf32>,
    %37 = vector.extract_strided_slice %11 {offsets = [0, 8], sizes = [8, 8], strides = [1, 1]} : vector<8x32xbf16> to vector<8x8xbf16>
    %38 = vector.shape_cast %37 : vector<8x8xbf16> to vector<1x8x8xbf16>
    %39 = vector.extract_strided_slice %13 {offsets = [0, 8], sizes = [8, 8], strides = [1, 1]} : vector<8x64xbf16> to vector<8x8xbf16>
    %40 = vector.shape_cast %39 : vector<8x8xbf16> to vector<1x8x8xbf16>
    %41 = vector.extract_strided_slice %13 {offsets = [0, 40], sizes = [8, 8], strides = [1, 1]} : vector<8x64xbf16> to vector<8x8xbf16>
    %42 = vector.shape_cast %41 : vector<8x8xbf16> to vector<1x8x8xbf16>
    %cst_14 = arith.constant dense<0.000000e+00> : vector<1x8x8xf32>
    %43 = tpu.matmul %38, %40, %cst_14 {dimension_numbers = #tpu.dot_dimension_numbers<[2], [2], [1], [1], [0, 0, 0, 1, 1, 1], [0], [0]>} : vector<1x8x8xbf16>, vector<1x8x8xbf16>, vector<1x8x8xf32> -> vector<1x8x8xf32>
    %cst_15 = arith.constant dense<0xFF800000> : vector<1x8xf32>
    %44 = vector.multi_reduction <maximumf>, %43, %cst_15 [2] : vector<1x8x8xf32> to vector<1x8xf32>
    %45 = vector.shape_cast %44 : vector<1x8xf32> to vector<1x8x1xf32>
    %46 = vector.broadcast %45 : vector<1x8x1xf32> to vector<1x8x8xf32>
    %47 = arith.subf %43, %46 : vector<1x8x8xf32>
    %48 = math.exp %47 : vector<1x8x8xf32>
    %cst_16 = arith.constant dense<0.000000e+00> : vector<1x8xf32>
    %49 = vector.multi_reduction <add>, %48, %cst_16 [2] : vector<1x8x8xf32> to vector<1x8xf32>
    %50 = vector.shape_cast %49 : vector<1x8xf32> to vector<1x8x1xf32>
    %51 = arith.truncf %48 : vector<1x8x8xf32> to vector<1x8x8xbf16>
    %cst_17 = arith.constant dense<0.000000e+00> : vector<1x8x8xf32>
    %52 = tpu.matmul %51, %42, %cst_17 {dimension_numbers = #tpu.dot_dimension_numbers<[2], [1], [1], [2], [0, 0, 0, 1, 1, 2], [0], [0]>} : vector<1x8x8xbf16>, vector<1x8x8xbf16>, vector<1x8x8xf32> -> vector<1x8x8xf32>
    %53 = tpu.reciprocal %50 {approx = true} : vector<1x8x1xf32> -> vector<1x8x1xf32>
    %54 = vector.broadcast %53 : vector<1x8x1xf32> to vector<1x8x8xf32>
    %55 = arith.mulf %52, %54 : vector<1x8x8xf32>
    %56 = vector.extract_strided_slice %8 {offsets = [0, 8], sizes = [8, 8], strides = [1, 1]} : vector<8x32xf32> to vector<8x8xf32>
    %57 = vector.shape_cast %56 : vector<8x8xf32> to vector<1x8x8xf32>
    %58 = arith.addf %57, %55 : vector<1x8x8xf32>
    %c0_18 = arith.constant 0 : index
    %c0_19 = arith.constant 0 : index
    %c8 = arith.constant 8 : index
    %59 = vector.load %arg7[%c0_18, %c0_19, %c8] : memref<1x8x32xf32, #tpu.memory_space<vmem>>, vector<1x8x8xf32>
    tpu.vector_store %arg7[%c0_18, %c0_19, %c8], %58 {strides = array<i32>} : memref<1x8x32xf32, #tpu.memory_space<vmem>>, vector<1x8x8xf32>,
    %60 = vector.extract_strided_slice %11 {offsets = [0, 16], sizes = [8, 8], strides = [1, 1]} : vector<8x32xbf16> to vector<8x8xbf16>
    %61 = vector.shape_cast %60 : vector<8x8xbf16> to vector<1x8x8xbf16>
    %62 = vector.extract_strided_slice %13 {offsets = [0, 16], sizes = [8, 8], strides = [1, 1]} : vector<8x64xbf16> to vector<8x8xbf16>
    %63 = vector.shape_cast %62 : vector<8x8xbf16> to vector<1x8x8xbf16>
    %64 = vector.extract_strided_slice %13 {offsets = [0, 48], sizes = [8, 8], strides = [1, 1]} : vector<8x64xbf16> to vector<8x8xbf16>
    %65 = vector.shape_cast %64 : vector<8x8xbf16> to vector<1x8x8xbf16>
    %cst_20 = arith.constant dense<0.000000e+00> : vector<1x8x8xf32>
    %66 = tpu.matmul %61, %63, %cst_20 {dimension_numbers = #tpu.dot_dimension_numbers<[2], [2], [1], [1], [0, 0, 0, 1, 1, 1], [0], [0]>} : vector<1x8x8xbf16>, vector<1x8x8xbf16>, vector<1x8x8xf32> -> vector<1x8x8xf32>
    %cst_21 = arith.constant dense<0xFF800000> : vector<1x8xf32>
    %67 = vector.multi_reduction <maximumf>, %66, %cst_21 [2] : vector<1x8x8xf32> to vector<1x8xf32>
    %68 = vector.shape_cast %67 : vector<1x8xf32> to vector<1x8x1xf32>
    %69 = vector.broadcast %68 : vector<1x8x1xf32> to vector<1x8x8xf32>
    %70 = arith.subf %66, %69 : vector<1x8x8xf32>
    %71 = math.exp %70 : vector<1x8x8xf32>
    %cst_22 = arith.constant dense<0.000000e+00> : vector<1x8xf32>
    %72 = vector.multi_reduction <add>, %71, %cst_22 [2] : vector<1x8x8xf32> to vector<1x8xf32>
    %73 = vector.shape_cast %72 : vector<1x8xf32> to vector<1x8x1xf32>
    %74 = arith.truncf %71 : vector<1x8x8xf32> to vector<1x8x8xbf16>
    %cst_23 = arith.constant dense<0.000000e+00> : vector<1x8x8xf32>
    %75 = tpu.matmul %74, %65, %cst_23 {dimension_numbers = #tpu.dot_dimension_numbers<[2], [1], [1], [2], [0, 0, 0, 1, 1, 2], [0], [0]>} : vector<1x8x8xbf16>, vector<1x8x8xbf16>, vector<1x8x8xf32> -> vector<1x8x8xf32>
    %76 = tpu.reciprocal %73 {approx = true} : vector<1x8x1xf32> -> vector<1x8x1xf32>
    %77 = vector.broadcast %76 : vector<1x8x1xf32> to vector<1x8x8xf32>
    %78 = arith.mulf %75, %77 : vector<1x8x8xf32>
    %79 = vector.extract_strided_slice %8 {offsets = [0, 16], sizes = [8, 8], strides = [1, 1]} : vector<8x32xf32> to vector<8x8xf32>
    %80 = vector.shape_cast %79 : vector<8x8xf32> to vector<1x8x8xf32>
    %81 = arith.addf %80, %78 : vector<1x8x8xf32>
    %c0_24 = arith.constant 0 : index
    %c0_25 = arith.constant 0 : index
    %c16 = arith.constant 16 : index
    %82 = vector.load %arg7[%c0_24, %c0_25, %c16] : memref<1x8x32xf32, #tpu.memory_space<vmem>>, vector<1x8x8xf32>
    tpu.vector_store %arg7[%c0_24, %c0_25, %c16], %81 {strides = array<i32>} : memref<1x8x32xf32, #tpu.memory_space<vmem>>, vector<1x8x8xf32>,
    %83 = vector.extract_strided_slice %11 {offsets = [0, 24], sizes = [8, 8], strides = [1, 1]} : vector<8x32xbf16> to vector<8x8xbf16>
    %84 = vector.shape_cast %83 : vector<8x8xbf16> to vector<1x8x8xbf16>
    %85 = vector.extract_strided_slice %13 {offsets = [0, 24], sizes = [8, 8], strides = [1, 1]} : vector<8x64xbf16> to vector<8x8xbf16>
    %86 = vector.shape_cast %85 : vector<8x8xbf16> to vector<1x8x8xbf16>
    %87 = vector.extract_strided_slice %13 {offsets = [0, 56], sizes = [8, 8], strides = [1, 1]} : vector<8x64xbf16> to vector<8x8xbf16>
    %88 = vector.shape_cast %87 : vector<8x8xbf16> to vector<1x8x8xbf16>
    %cst_26 = arith.constant dense<0.000000e+00> : vector<1x8x8xf32>
    %89 = tpu.matmul %84, %86, %cst_26 {dimension_numbers = #tpu.dot_dimension_numbers<[2], [2], [1], [1], [0, 0, 0, 1, 1, 1], [0], [0]>} : vector<1x8x8xbf16>, vector<1x8x8xbf16>, vector<1x8x8xf32> -> vector<1x8x8xf32>
    %cst_27 = arith.constant dense<0xFF800000> : vector<1x8xf32>
    %90 = vector.multi_reduction <maximumf>, %89, %cst_27 [2] : vector<1x8x8xf32> to vector<1x8xf32>
    %91 = vector.shape_cast %90 : vector<1x8xf32> to vector<1x8x1xf32>
    %92 = vector.broadcast %91 : vector<1x8x1xf32> to vector<1x8x8xf32>
    %93 = arith.subf %89, %92 : vector<1x8x8xf32>
    %94 = math.exp %93 : vector<1x8x8xf32>
    %cst_28 = arith.constant dense<0.000000e+00> : vector<1x8xf32>
    %95 = vector.multi_reduction <add>, %94, %cst_28 [2] : vector<1x8x8xf32> to vector<1x8xf32>
    %96 = vector.shape_cast %95 : vector<1x8xf32> to vector<1x8x1xf32>
    %97 = arith.truncf %94 : vector<1x8x8xf32> to vector<1x8x8xbf16>
    %cst_29 = arith.constant dense<0.000000e+00> : vector<1x8x8xf32>
    %98 = tpu.matmul %97, %88, %cst_29 {dimension_numbers = #tpu.dot_dimension_numbers<[2], [1], [1], [2], [0, 0, 0, 1, 1, 2], [0], [0]>} : vector<1x8x8xbf16>, vector<1x8x8xbf16>, vector<1x8x8xf32> -> vector<1x8x8xf32>
    %99 = tpu.reciprocal %96 {approx = true} : vector<1x8x1xf32> -> vector<1x8x1xf32>
    %100 = vector.broadcast %99 : vector<1x8x1xf32> to vector<1x8x8xf32>
    %101 = arith.mulf %98, %100 : vector<1x8x8xf32>
    %102 = vector.extract_strided_slice %8 {offsets = [0, 24], sizes = [8, 8], strides = [1, 1]} : vector<8x32xf32> to vector<8x8xf32>
    %103 = vector.shape_cast %102 : vector<8x8xf32> to vector<1x8x8xf32>
    %104 = arith.addf %103, %101 : vector<1x8x8xf32>
    %c0_30 = arith.constant 0 : index
    %c0_31 = arith.constant 0 : index
    %c24 = arith.constant 24 : index
    %105 = vector.load %arg7[%c0_30, %c0_31, %c24] : memref<1x8x32xf32, #tpu.memory_space<vmem>>, vector<1x8x8xf32>
    tpu.vector_store %arg7[%c0_30, %c0_31, %c24], %104 {strides = array<i32>} : memref<1x8x32xf32, #tpu.memory_space<vmem>>, vector<1x8x8xf32>,
    %c0_32 = arith.constant 0 : index
    %c0_33 = arith.constant 0 : index
    %c0_34 = arith.constant 0 : index
    %106 = vector.load %arg7[%c0_32, %c0_33, %c0_34] : memref<1x8x32xf32, #tpu.memory_space<vmem>>, vector<1x8x32xf32>
    %107 = vector.shape_cast %106 : vector<1x8x32xf32> to vector<8x32xf32>
    %108 = arith.truncf %107 : vector<8x32xf32> to vector<8x32xbf16>
    %c0_35 = arith.constant 0 : index
    %c0_36 = arith.constant 0 : index
    %109 = vector.load %arg4[%c0_35, %c0_36] : memref<32x32xbf16, #tpu.memory_space<vmem>>, vector<32x32xbf16>
    %cst_37 = arith.constant dense<0.000000e+00> : vector<8x32xf32>
    %110 = tpu.matmul %108, %109, %cst_37 {dimension_numbers = #tpu.dot_dimension_numbers<[1], [0], [0], [1], [0, 0, 1, 1], [], []>} : vector<8x32xbf16>, vector<32x32xbf16>, vector<8x32xf32> -> vector<8x32xf32>
    %c0_38 = arith.constant 0 : index
    %c0_39 = arith.constant 0 : index
    %111 = vector.load %arg5[%c0_38, %c0_39] : memref<1x32xf32, #tpu.memory_space<vmem>>, vector<1x32xf32>
    %112 = vector.broadcast %111 : vector<1x32xf32> to vector<8x32xf32>
    %113 = arith.addf %110, %112 : vector<8x32xf32>
    %cst_40 = arith.constant 0.000000e+00 : f32
    %114 = vector.broadcast %cst_40 : f32 to vector<8x32xf32>
    %115 = arith.maximumf %113, %114 : vector<8x32xf32>
    %116 = arith.addf %107, %115 : vector<8x32xf32>
    %117 = vector.shape_cast %116 : vector<8x32xf32> to vector<1x8x32xf32>
    %c0_41 = arith.constant 0 : index
    %c0_42 = arith.constant 0 : index
    %c0_43 = arith.constant 0 : index
    %118 = vector.load %arg6[%c0_41, %c0_42, %c0_43] : memref<1x8x32xf32, #tpu.memory_space<vmem>>, vector<1x8x32xf32>
    tpu.vector_store %arg6[%c0_41, %c0_42, %c0_43], %117 {strides = array<i32>} : memref<1x8x32xf32, #tpu.memory_space<vmem>>, vector<1x8x32xf32>,
    return
  }
  func.func @transform_0(%arg0: i32) -> (i32, i32, i32) {
    %c0_i32 = arith.constant 0 : i32
    %c0_i32_0 = arith.constant 0 : i32
    %c0_i32_1 = arith.constant 0 : i32
    return %arg0, %c0_i32, %c0_i32_0 : i32, i32, i32
  }
  func.func @transform_1(%arg0: i32) -> (i32, i32) {
    %c0_i32 = arith.constant 0 : i32
    %c0_i32_0 = arith.constant 0 : i32
    %c0_i32_1 = arith.constant 0 : i32
    return %c0_i32, %c0_i32_0 : i32, i32
  }
  func.func @transform_2(%arg0: i32) -> (i32, i32) {
    %c0_i32 = arith.constant 0 : i32
    %c0_i32_0 = arith.constant 0 : i32
    %c0_i32_1 = arith.constant 0 : i32
    return %c0_i32, %c0_i32_0 : i32, i32
  }
  func.func @transform_3(%arg0: i32) -> (i32, i32) {
    %c0_i32 = arith.constant 0 : i32
    %c0_i32_0 = arith.constant 0 : i32
    %c0_i32_1 = arith.constant 0 : i32
    return %c0_i32, %c0_i32_0 : i32, i32
  }
  func.func @transform_4(%arg0: i32) -> (i32, i32) {
    %c0_i32 = arith.constant 0 : i32
    %c0_i32_0 = arith.constant 0 : i32
    %c0_i32_1 = arith.constant 0 : i32
    return %c0_i32, %c0_i32_0 : i32, i32
  }
  func.func @transform_5(%arg0: i32) -> (i32, i32, i32) {
    %c0_i32 = arith.constant 0 : i32
    %c0_i32_0 = arith.constant 0 : i32
    %c0_i32_1 = arith.constant 0 : i32
    return %arg0, %c0_i32, %c0_i32_0 : i32, i32, i32
  }
}

</mosaic_0001>

<llo_original>
// kernel: tpu_custom_call.1
$region0: #{tpu_custom_call.1}
  #allocation0 [shape = 'u32[]', space=smem, size = 0x4, offset = 0x4, fixed_abs, tag = 'smem constant byte address 0x4 - core index']
  #allocation1 [shape = 'u32[144,128]{1,0:T(1,128)}', space=vmem, size = 0x12000, scoped, tag = 'internal scratch']
  #allocation2 [shape = 'f32[1,8,32]{2,1,0:T(8,128)}', space=vmem, size = 0x1000, scoped, tag = 'scratch operand']
  %s0 = inlined_call_operand.hbm [shape: f32[2,8,16], index: 0, kind: input, shape index: {}]
  %s1 = inlined_call_operand.hbm [shape: bf16[16,96], index: 1, kind: input, shape index: {}]
  %s2 = inlined_call_operand.vmem [shape: f32[1,96], index: 2, kind: input, shape index: {}]
  %s3 = inlined_call_operand.hbm [shape: bf16[32,32], index: 3, kind: input, shape index: {}]
  %s4 = inlined_call_operand.vmem [shape: f32[1,32], index: 4, kind: input, shape index: {}]
  %s5 = inlined_call_operand.hbm [shape: f32[2,8,32], index: 5, kind: output, shape index: {}]
  %s6 = sld [smem:[#allocation0]]
  $region65: #{tpu_custom_call.1} parent=0
    _
  %s8 = ssub.s32 1, %s6
  %s9 = scalar_select 0, %s8, %s6
  $region1: #{tpu_custom_call.1} parent=0
    #allocation3 [shape = 'u8[8192]{0}', space=vmem, size = 0x2000, scoped, tag = 'input window, operand 0']
    #allocation4 [shape = 's32[2]{0}', space=sflag, size = 0x8, scoped, tag = 'scoped memory for tpu_custom_call.1']
    #allocation5 [shape = 's32[2]{0}', space=sflag, size = 0x8, scoped, tag = 'scoped memory for tpu_custom_call.1']
    #allocation6 [shape = 'u8[4096]{0}', space=vmem, size = 0x1000, scoped, tag = 'input window, operand 1, single buffered']
    #allocation7 [shape = 's32[1]{0}', space=sflag, size = 0x4, scoped, tag = 'scoped memory for tpu_custom_call.1']
    #allocation8 [shape = 'u8[8192]{0}', space=vmem, size = 0x2000, scoped, tag = 'input window, operand 3, single buffered']
    #allocation9 [shape = 'u8[8192]{0}', space=vmem, size = 0x2000, scoped, tag = 'output window, operand 0']
    %10 = vsyncpa [#allocation4], 0
    %s11 = scalar_lea.sflag [#allocation4], 1
    %12 = vsyncpa %s11, 0
    %13 = vsyncpa [#allocation7], 0
    %14 = vsyncpa [#allocation5], 0
    %s15 = scalar_lea.sflag [#allocation5], 1
    %16 = vsyncpa %s15, 0
    loop: start=0, step=1, limit=4
    $region2: #{tpu_custom_call.1} parent=1 // loop_pre_header
      _
    $region3: #{tpu_custom_call.1} parent=1 // loop_header
      %s18 = sphi 0, %s22
      %p19 = scmp.ge.s32.totalorder %s18, 4
      %s28 = sphi 0, %s30
      %s31 = sphi 0, %s28
      %s32 = sphi 0, %s31
      %s48 = sphi 0, %s32
      %s52 = sphi 0, %s52
      %s54 = sphi 0, %s52
      %s55 = sphi 0, %s54
      %s69 = sphi 0, %s55
      %s73 = sphi 0, %s73
      %s75 = sphi 0, %s73
      %s76 = sphi 0, %s75
      %s90 = sphi 0, %s76
      %s94 = sphi 0, %s94
      %s96 = sphi 0, %s94
      %s97 = sphi 0, %s96
      %s111 = sphi 0, %s97
      %s115 = sphi 0, %s115
      %s117 = sphi 0, %s115
      %s118 = sphi 0, %s117
      %s132 = sphi 0, %s118
      %s138 = sphi 0, %s140
      %s141 = sphi 0, %s138
      %s142 = sphi 0, %s141
      %s158 = sphi 0, %s142
    $region4: #{tpu_custom_call.1} parent=1 // loop_header_branch
      %21 = sbr.rel (%p19) target = $region8
    $region5: #{tpu_custom_call.1} parent=1 // loop_body
      %s23 = ssub.s32 %s18, 1
      %s24 = ssub.s32 %s18, 2
      %s25 = sadd.s32 %s18, 1
      %s26 = ssub.s32 %s18, %s25
      %p27 = scmp.eq.s32.totalorder %s26, 0
      %s29 = sadd.s32 %s28, 1
      %s30 = scalar_select %p27, %s28, %s29
      %p33 = pneg %p27
      %p34 = scmp.eq.s32.totalorder %s18, 1
      %p35 = por %p33, %p34
      %p36 = scmp.ne.s32.totalorder %s28, %s31
      %p37 = scmp.eq.s32.totalorder %s18, 0
      %p38 = por %p36, %p37
      %p39 = scmp.ne.s32.totalorder %s28, %s31
      %p40 = scmp.eq.s32.totalorder %s23, 1
      %p41 = por %p39, %p40
      %p42 = scmp.ne.s32.totalorder %s31, %s32
      %p43 = scmp.eq.s32.totalorder %s23, 0
      %p44 = por %p42, %p43
      %p45 = scmp.ne.s32.totalorder %s31, %s32
      %p46 = scmp.eq.s32.totalorder %s24, 1
      %p47 = por %p45, %p46
      %p49 = scmp.ne.s32.totalorder %s32, %s48
      %p50 = scmp.eq.s32.totalorder %s24, 0
      %p51 = por %p49, %p50
      %s53 = sadd.s32 %s52, 1
      %p56 = scmp.eq.s32.totalorder %s18, 1
      %p57 = scmp.ne.s32.totalorder %s52, %s54
      %p58 = scmp.eq.s32.totalorder %s18, 0
      %p59 = por %p57, %p58
      %p60 = scmp.ne.s32.totalorder %s52, %s54
      %p61 = scmp.eq.s32.totalorder %s23, 1
      %p62 = por %p60, %p61
      %p63 = scmp.ne.s32.totalorder %s54, %s55
      %p64 = scmp.eq.s32.totalorder %s23, 0
      %p65 = por %p63, %p64
      %p66 = scmp.ne.s32.totalorder %s54, %s55
      %p67 = scmp.eq.s32.totalorder %s24, 1
      %p68 = por %p66, %p67
      %p70 = scmp.ne.s32.totalorder %s55, %s69
      %p71 = scmp.eq.s32.totalorder %s24, 0
      %p72 = por %p70, %p71
      %s74 = sadd.s32 %s73, 1
      %p77 = scmp.eq.s32.totalorder %s18, 1
      %p78 = scmp.ne.s32.totalorder %s73, %s75
      %p79 = scmp.eq.s32.totalorder %s18, 0
      %p80 = por %p78, %p79
      %p81 = scmp.ne.s32.totalorder %s73, %s75
      %p82 = scmp.eq.s32.totalorder %s23, 1
      %p83 = por %p81, %p82
      %p84 = scmp.ne.s32.totalorder %s75, %s76
      %p85 = scmp.eq.s32.totalorder %s23, 0
      %p86 = por %p84, %p85
      %p87 = scmp.ne.s32.totalorder %s75, %s76
      %p88 = scmp.eq.s32.totalorder %s24, 1
      %p89 = por %p87, %p88
      %p91 = scmp.ne.s32.totalorder %s76, %s90
      %p92 = scmp.eq.s32.totalorder %s24, 0
      %p93 = por %p91, %p92
      %s95 = sadd.s32 %s94, 1
      %p98 = scmp.eq.s32.totalorder %s18, 1
      %p99 = scmp.ne.s32.totalorder %s94, %s96
      %p100 = scmp.eq.s32.totalorder %s18, 0
      %p101 = por %p99, %p100
      %p102 = scmp.ne.s32.totalorder %s94, %s96
      %p103 = scmp.eq.s32.totalorder %s23, 1
      %p104 = por %p102, %p103
      %p105 = scmp.ne.s32.totalorder %s96, %s97
      %p106 = scmp.eq.s32.totalorder %s23, 0
      %p107 = por %p105, %p106
      %p108 = scmp.ne.s32.totalorder %s96, %s97
      %p109 = scmp.eq.s32.totalorder %s24, 1
      %p110 = por %p108, %p109
      %p112 = scmp.ne.s32.totalorder %s97, %s111
      %p113 = scmp.eq.s32.totalorder %s24, 0
      %p114 = por %p112, %p113
      %s116 = sadd.s32 %s115, 1
      %p119 = scmp.eq.s32.totalorder %s18, 1
      %p120 = scmp.ne.s32.totalorder %s115, %s117
      %p121 = scmp.eq.s32.totalorder %s18, 0
      %p122 = por %p120, %p121
      %p123 = scmp.ne.s32.totalorder %s115, %s117
      %p124 = scmp.eq.s32.totalorder %s23, 1
      %p125 = por %p123, %p124
      %p126 = scmp.ne.s32.totalorder %s117, %s118
      %p127 = scmp.eq.s32.totalorder %s23, 0
      %p128 = por %p126, %p127
      %p129 = scmp.ne.s32.totalorder %s117, %s118
      %p130 = scmp.eq.s32.totalorder %s24, 1
      %p131 = por %p129, %p130
      %p133 = scmp.ne.s32.totalorder %s118, %s132
      %p134 = scmp.eq.s32.totalorder %s24, 0
      %p135 = por %p133, %p134
      %s136 = ssub.s32 %s18, %s25
      %p137 = scmp.eq.s32.totalorder %s136, 0
      %s139 = sadd.s32 %s138, 1
      %s140 = scalar_select %p137, %s138, %s139
      %p143 = pneg %p137
      %p144 = scmp.eq.s32.totalorder %s18, 1
      %p145 = por %p143, %p144
      %p146 = scmp.ne.s32.totalorder %s138, %s141
      %p147 = scmp.eq.s32.totalorder %s18, 0
      %p148 = por %p146, %p147
      %p149 = scmp.ne.s32.totalorder %s138, %s141
      %p150 = scmp.eq.s32.totalorder %s23, 1
      %p151 = por %p149, %p150
      %p152 = scmp.ne.s32.totalorder %s141, %s142
      %p153 = scmp.eq.s32.totalorder %s23, 0
      %p154 = por %p152, %p153
      %p155 = scmp.ne.s32.totalorder %s141, %s142
      %p156 = scmp.eq.s32.totalorder %s24, 1
      %p157 = por %p155, %p156
      %p159 = scmp.ne.s32.totalorder %s142, %s158
      %p160 = scmp.eq.s32.totalorder %s24, 0
      %p161 = por %p159, %p160
      %p162 = scmp.le.s32.totalorder 1, %s18
      %p163 = scmp.lt.s32.totalorder %s18, 3
      %p164 = pnand %p162, %p163
      %p165 = pneg %p164
      // Predicated region
      $region9: #{tpu_custom_call.1} parent=5 // pred_check
        _
      $region10: #{tpu_custom_call.1} parent=5 // pred_check_branch
        %167 = sbr.rel (%p164) target = $region12
      $region11: #{tpu_custom_call.1} parent=5 // pred_region
        %s168 = ssub.s32 %s18, 1
        // Predicated region
        $region13: #{tpu_custom_call.1} parent=11 // pred_check
          %p169 = pneg %p65
        $region14: #{tpu_custom_call.1} parent=11 // pred_check_branch
          %171 = sbr.rel (%p169) target = $region16
        $region15: #{tpu_custom_call.1} parent=11 // pred_region
          %s173 = ssub.s32 128, 128
          %174 = vsyncadd [#allocation7], %s173
          %s175 = sshll.u32 [#allocation6], 4
          %s176 = int_to_ptr.vmem [resolvable:$true] %s175
          %181 = dma.hbm_to_vmem [thread:$0]  %s1, 128, %s176, [#allocation7], 64, 64, 4
        $region16: #{tpu_custom_call.1} parent=11 // pred_fallthru
          _
        // Predicated region
        $region17: #{tpu_custom_call.1} parent=11 // pred_check
          %p182 = pneg %p86
        $region18: #{tpu_custom_call.1} parent=11 // pred_check_branch
          %184 = sbr.rel (%p182) target = $region20
        $region19: #{tpu_custom_call.1} parent=11 // pred_region
          _
        $region20: #{tpu_custom_call.1} parent=11 // pred_fallthru
          _
        // Predicated region
        $region21: #{tpu_custom_call.1} parent=11 // pred_check
          %p185 = pneg %p107
        $region22: #{tpu_custom_call.1} parent=11 // pred_check_branch
          %187 = sbr.rel (%p185) target = $region24
        $region23: #{tpu_custom_call.1} parent=11 // pred_region
          %s189 = ssub.s32 256, 256
          %190 = vsyncadd [#allocation7], %s189
          %s191 = sshll.u32 [#allocation8], 4
          %s192 = int_to_ptr.vmem [resolvable:$true] %s191
          %197 = dma.hbm_to_vmem [thread:$0]  %s3, 256, %s192, [#allocation7], 64, 64, 4
        $region24: #{tpu_custom_call.1} parent=11 // pred_fallthru
          _
        // Predicated region
        $region25: #{tpu_custom_call.1} parent=11 // pred_check
          %p198 = pneg %p128
        $region26: #{tpu_custom_call.1} parent=11 // pred_check_branch
          %200 = sbr.rel (%p198) target = $region28
        $region27: #{tpu_custom_call.1} parent=11 // pred_region
          _
        $region28: #{tpu_custom_call.1} parent=11 // pred_fallthru
          _
      $region12: #{tpu_custom_call.1} parent=5 // pred_fallthru
        _
      %p201 = scmp.lt.s32.totalorder %s18, 2
      // Predicated region
      $region29: #{tpu_custom_call.1} parent=5 // pred_check
        %p202 = pneg %p201
      $region30: #{tpu_custom_call.1} parent=5 // pred_check_branch
        %204 = sbr.rel (%p202) target = $region32
      $region31: #{tpu_custom_call.1} parent=5 // pred_region
        // Predicated region
        $region33: #{tpu_custom_call.1} parent=31 // pred_check
          %p205 = pneg %p38
        $region34: #{tpu_custom_call.1} parent=31 // pred_check_branch
          %207 = sbr.rel (%p205) target = $region36
        $region35: #{tpu_custom_call.1} parent=31 // pred_region
          %s208 = sand.u32 %s28, 1
          %s209 = scalar_lea.sflag [#allocation4], %s208
          %s210 = sand.u32 %s28, 1
          %s211 = smul.addr %s210, 8
          %s212 = scalar_lea.vmem [#allocation3], %s211
          %s214 = ssub.s32 128, 128
          %215 = vsyncadd %s209, %s214
          %s216 = smul.addr %s18, 128
          %s217 = scalar_lea.hbm %s0, %s216
          %s219 = sshll.u32 %s212, 4
          %s220 = int_to_ptr.vmem [resolvable:$true] %s219
          %222 = dma.hbm_to_vmem [thread:$0]  %s217, 128, %s220, %s209
        $region36: #{tpu_custom_call.1} parent=31 // pred_fallthru
          _
      $region32: #{tpu_custom_call.1} parent=5 // pred_fallthru
        _
      %p223 = scmp.le.s32.totalorder 1, %s18
      %p224 = scmp.lt.s32.totalorder %s18, 3
      %p225 = pnand %p223, %p224
      %p226 = pneg %p225
      // Predicated region
      $region37: #{tpu_custom_call.1} parent=5 // pred_check
        _
      $region38: #{tpu_custom_call.1} parent=5 // pred_check_branch
        %228 = sbr.rel (%p225) target = $region40
      $region39: #{tpu_custom_call.1} parent=5 // pred_region
        %s229 = ssub.s32 %s18, 1
        %s230 = sand.u32 %s31, 1
        %s231 = scalar_lea.sflag [#allocation4], %s230
        %s232 = sand.u32 %s31, 1
        %s233 = smul.addr %s232, 8
        %s234 = scalar_lea.vmem [#allocation3], %s233
        // Predicated region
        $region41: #{tpu_custom_call.1} parent=39 // pred_check
          %p235 = pneg %p44
        $region42: #{tpu_custom_call.1} parent=39 // pred_check_branch
          %237 = sbr.rel (%p235) target = $region44
        $region43: #{tpu_custom_call.1} parent=39 // pred_region
          %238 = dma.done %s231, 128
        $region44: #{tpu_custom_call.1} parent=39 // pred_fallthru
          _
        // Predicated region
        $region45: #{tpu_custom_call.1} parent=39 // pred_check
          %p239 = pneg %p65
        $region46: #{tpu_custom_call.1} parent=39 // pred_check_branch
          %241 = sbr.rel (%p239) target = $region48
        $region47: #{tpu_custom_call.1} parent=39 // pred_region
          %242 = dma.done [#allocation7], 128
        $region48: #{tpu_custom_call.1} parent=39 // pred_fallthru
          _
        // Predicated region
        $region49: #{tpu_custom_call.1} parent=39 // pred_check
          %p243 = pneg %p107
        $region50: #{tpu_custom_call.1} parent=39 // pred_check_branch
          %245 = sbr.rel (%p243) target = $region52
        $region51: #{tpu_custom_call.1} parent=39 // pred_region
          %246 = dma.done [#allocation7], 256
        $region52: #{tpu_custom_call.1} parent=39 // pred_fallthru
          _
        %s247 = sand.u32 %s31, 1
        %s248 = scalar_lea.sflag [#allocation4], %s247
        %s249 = sand.u32 %s31, 1
        %s250 = smul.addr %s249, 8
        %s251 = scalar_lea.vmem [#allocation3], %s250
        %p252 = pneg %p44
        %p253 = pneg %p41
        %p254 = pneg %p65
        %p255 = pneg %p62
        %p256 = pneg %p86
        %p257 = pneg %p83
        %p258 = pneg %p107
        %p259 = pneg %p104
        %p260 = pneg %p128
        %p261 = pneg %p125
        %p262 = pneg %p154
        %p263 = pneg %p151
        %s264 = sand.u32 %s141, 1
        %s265 = scalar_lea.sflag [#allocation5], %s264
        %s266 = sand.u32 %s141, 1
        %s267 = smul.addr %s266, 8
        %s268 = scalar_lea.vmem [#allocation9], %s267
        %v270 = vld [vmem:[%s234] sm:$0xff]
        %v271 = vpack.c.bf16 %v270, %v270
        %v272 = vld [vmem:[#allocation6] sm:$0xf]
        %v273 = vld [vmem:[#allocation6 + $0x4] sm:$0xf]
        %v274 = vld [vmem:[%s2] sm:$0x1]
        %v276 = vlaneseq
        %v277 = vshrl.u32 %v276, 7
        %v278 = vsub.s32 0, %v277
        %v279 = vrot.slane %v274, %v278
        %v283 = vunpack.c.l.b16 %v272
        %v284 = vunpack.c.l.b16 %v273
        %v285 = vpack.c.b16 %v284, %v283
        %vm287 = vcmask 130048
        %v289 = vsel %vm287, %v271, 0
        %291 = vmatprep.subr.bf16.mxu0 0
        %292 = vmatpush1.bf16.msra.mxu0 %v285
        %293 = vmatprep.subr.bf16.mxu0 0
        %294 = vmatpush1.bf16.msra.mxu0 0
        %295 = vmatprep.subr.bf16.mxu0 0
        %296 = vmatpush1.bf16.msra.mxu0 0
        %297 = vmatprep.subr.bf16.mxu0 0
        %298 = vmatpush1.bf16.msra.mxu0 0
        %299 = vmatprep.subr.bf16.mxu0 0
        %300 = vmatpush1.bf16.msra.mxu0 0
        %301 = vmatprep.subr.bf16.mxu0 0
        %302 = vmatpush1.bf16.msra.mxu0 0
        %303 = vmatprep.subr.bf16.mxu0 0
        %304 = vmatpush1.bf16.msra.mxu0 0
        %305 = vmatprep.subr.bf16.mxu0 0
        %306 = vmatpush1.bf16.msra.mxu0 0
        %307 = vmatprep.subr.bf16.mxu0 0
        %308 = vmatpush1.bf16.msra.mxu0 0
        %309 = vmatprep.subr.bf16.mxu0 0
        %310 = vmatpush1.bf16.msra.mxu0 0
        %311 = vmatprep.subr.bf16.mxu0 0
        %312 = vmatpush1.bf16.msra.mxu0 0
        %313 = vmatprep.subr.bf16.mxu0 0
        %314 = vmatpush1.bf16.msra.mxu0 0
        %315 = vmatprep.subr.bf16.mxu0 0
        %316 = vmatpush1.bf16.msra.mxu0 0
        %317 = vmatprep.subr.bf16.mxu0 0
        %318 = vmatpush1.bf16.msra.mxu0 0
        %319 = vmatprep.subr.bf16.mxu0 0
        %320 = vmatpush1.bf16.msra.mxu0 0
        %321 = vmatprep.subr.bf16.mxu0 0
        %322 = vmatpush1.bf16.msra.mxu0 0
        %323 = vmatprep.mubr.bf16.mxu0 0
        %324 = vmatmul.mubr.bf16.gmra.mrb[0].mxu0 %v289
        %v325 = vpop.f32.mrb[0].mxu0
        %v326 = vadd.f32 %v279, %v325
        %v327 = vpop.f32.mrb[0].mxu0
        %v328 = vpop.f32.mrb[0].mxu0
        %v329 = vpop.f32.mrb[0].mxu0
        %330 = vdwg.mxu0
        %v331 = vmul.f32 %v326, 0.17677669
        %v332 = vpack.c.bf16 %v331, %v331
        %v333 = vpack.c.bf16 %v326, %v326
        %335 = vrot.lane.b32.xlu0 %v333, 96
        %v336 = vpop.permute.xlu0 %335
        %vm337 = vcmask 64512
        %v339 = vsel %vm337, %v332, 0
        %v342 = vsel %vm337, %v336, 0
        %344 = vmatprep.subr.bf16.mxu0 0
        %345 = vmatpush1.bf16.xpose.msra.mxu0 %v342
        %346 = vmatprep.subr.bf16.mxu0 0
        %347 = vmatpush1.bf16.xpose.msra.mxu0 0
        %348 = vmatprep.subr.bf16.mxu0 0
        %349 = vmatpush1.bf16.xpose.msra.mxu0 0
        %350 = vmatprep.subr.bf16.mxu0 0
        %351 = vmatpush1.bf16.xpose.msra.mxu0 0
        %352 = vmatprep.subr.bf16.mxu0 0
        %353 = vmatpush1.bf16.xpose.msra.mxu0 0
        %354 = vmatprep.subr.bf16.mxu0 0
        %355 = vmatpush1.bf16.xpose.msra.mxu0 0
        %356 = vmatprep.subr.bf16.mxu0 0
        %357 = vmatpush1.bf16.xpose.msra.mxu0 0
        %358 = vmatprep.subr.bf16.mxu0 0
        %359 = vmatpush1.bf16.xpose.msra.mxu0 0
        %360 = vmatprep.subr.bf16.mxu0 0
        %361 = vmatpush1.bf16.xpose.msra.mxu0 0
        %362 = vmatprep.subr.bf16.mxu0 0
        %363 = vmatpush1.bf16.xpose.msra.mxu0 0
        %364 = vmatprep.subr.bf16.mxu0 0
        %365 = vmatpush1.bf16.xpose.msra.mxu0 0
        %366 = vmatprep.subr.bf16.mxu0 0
        %367 = vmatpush1.bf16.xpose.msra.mxu0 0
        %368 = vmatprep.subr.bf16.mxu0 0
        %369 = vmatpush1.bf16.xpose.msra.mxu0 0
        %370 = vmatprep.subr.bf16.mxu0 0
        %371 = vmatpush1.bf16.xpose.msra.mxu0 0
        %372 = vmatprep.subr.bf16.mxu0 0
        %373 = vmatpush1.bf16.xpose.msra.mxu0 0
        %374 = vmatprep.subr.bf16.mxu0 0
        %375 = vmatpush1.bf16.xpose.msra.mxu0 0
        %376 = vmatprep.mubr.bf16.mxu0 0
        %377 = vmatmul.mubr.bf16.gmra.mrb[0].mxu0 %v339
        %v378 = vpop.f32.mrb[0].mxu0
        %v379 = vadd.f32 0.0, %v378
        %v380 = vpop.f32.mrb[0].mxu0
        %v381 = vpop.f32.mrb[0].mxu0
        %v382 = vpop.f32.mrb[0].mxu0
        %383 = vdwg.mxu0
        %v384 = vsel %vm337, %v379, -inf
        %385 = vmax.xlane.f32.xlu0 %v384
        %v386 = vpop.xlane.xlu0 %385
        %v387 = vsub.f32 %v379, %v386
        %v388 = vmul.f32 %v387, 1.442695
        %v389 = vpow.pop %v388
        %v390 = vsel %vm337, %v389, 0.0
        %391 = vadd.xlane.f32.xlu0 %v390
        %v392 = vpop.xlane.xlu0 %391
        %v393 = vpack.c.bf16 %v389, %v389
        %394 = vrot.lane.b32.xlu0 %v333, 64
        %v395 = vpop.permute.xlu0 %394
        %v397 = vsel %vm337, %v393, 0
        %vm399 = vcmask 1043456
        %v401 = vsel %vm399, %v395, 0
        %403 = vmatprep.subr.bf16.mxu0 0
        %404 = vmatpush1.bf16.msra.mxu0 %v401
        %405 = vmatprep.subr.bf16.mxu0 0
        %406 = vmatpush1.bf16.msra.mxu0 0
        %407 = vmatprep.subr.bf16.mxu0 0
        %408 = vmatpush1.bf16.msra.mxu0 0
        %409 = vmatprep.subr.bf16.mxu0 0
        %410 = vmatpush1.bf16.msra.mxu0 0
        %411 = vmatprep.subr.bf16.mxu0 0
        %412 = vmatpush1.bf16.msra.mxu0 0
        %413 = vmatprep.subr.bf16.mxu0 0
        %414 = vmatpush1.bf16.msra.mxu0 0
        %415 = vmatprep.subr.bf16.mxu0 0
        %416 = vmatpush1.bf16.msra.mxu0 0
        %417 = vmatprep.subr.bf16.mxu0 0
        %418 = vmatpush1.bf16.msra.mxu0 0
        %419 = vmatprep.subr.bf16.mxu0 0
        %420 = vmatpush1.bf16.msra.mxu0 0
        %421 = vmatprep.subr.bf16.mxu0 0
        %422 = vmatpush1.bf16.msra.mxu0 0
        %423 = vmatprep.subr.bf16.mxu0 0
        %424 = vmatpush1.bf16.msra.mxu0 0
        %425 = vmatprep.subr.bf16.mxu0 0
        %426 = vmatpush1.bf16.msra.mxu0 0
        %427 = vmatprep.subr.bf16.mxu0 0
        %428 = vmatpush1.bf16.msra.mxu0 0
        %429 = vmatprep.subr.bf16.mxu0 0
        %430 = vmatpush1.bf16.msra.mxu0 0
        %431 = vmatprep.subr.bf16.mxu0 0
        %432 = vmatpush1.bf16.msra.mxu0 0
        %433 = vmatprep.subr.bf16.mxu0 0
        %434 = vmatpush1.bf16.msra.mxu0 0
        %435 = vmatprep.mubr.bf16.mxu0 0
        %436 = vmatmul.mubr.bf16.gmra.mrb[0].mxu0 %v397
        %v437 = vpop.f32.mrb[0].mxu0
        %v438 = vadd.f32 0.0, %v437
        %v439 = vpop.f32.mrb[0].mxu0
        %v440 = vpop.f32.mrb[0].mxu0
        %v441 = vpop.f32.mrb[0].mxu0
        %442 = vdwg.mxu0
        %v443 = vrcp.pop %v392
        %v444 = vmul.f32 %v438, %v443
        %v445 = vadd.f32 %v326, %v444
        %446 = vst.msk [vmem:[#allocation2] sm:$0xff] %vm337, %v445
        %448 = vrot.lane.b32.xlu0 %v332, 120
        %v449 = vpop.permute.xlu0 %448
        %450 = vrot.lane.b32.xlu0 %v333, 88
        %v451 = vpop.permute.xlu0 %450
        %v453 = vsel %vm337, %v449, 0
        %v456 = vsel %vm337, %v451, 0
        %458 = vmatprep.subr.bf16.mxu0 0
        %459 = vmatpush1.bf16.xpose.msra.mxu0 %v456
        %460 = vmatprep.subr.bf16.mxu0 0
        %461 = vmatpush1.bf16.xpose.msra.mxu0 0
        %462 = vmatprep.subr.bf16.mxu0 0
        %463 = vmatpush1.bf16.xpose.msra.mxu0 0
        %464 = vmatprep.subr.bf16.mxu0 0
        %465 = vmatpush1.bf16.xpose.msra.mxu0 0
        %466 = vmatprep.subr.bf16.mxu0 0
        %467 = vmatpush1.bf16.xpose.msra.mxu0 0
        %468 = vmatprep.subr.bf16.mxu0 0
        %469 = vmatpush1.bf16.xpose.msra.mxu0 0
        %470 = vmatprep.subr.bf16.mxu0 0
        %471 = vmatpush1.bf16.xpose.msra.mxu0 0
        %472 = vmatprep.subr.bf16.mxu0 0
        %473 = vmatpush1.bf16.xpose.msra.mxu0 0
        %474 = vmatprep.subr.bf16.mxu0 0
        %475 = vmatpush1.bf16.xpose.msra.mxu0 0
        %476 = vmatprep.subr.bf16.mxu0 0
        %477 = vmatpush1.bf16.xpose.msra.mxu0 0
        %478 = vmatprep.subr.bf16.mxu0 0
        %479 = vmatpush1.bf16.xpose.msra.mxu0 0
        %480 = vmatprep.subr.bf16.mxu0 0
        %481 = vmatpush1.bf16.xpose.msra.mxu0 0
        %482 = vmatprep.subr.bf16.mxu0 0
        %483 = vmatpush1.bf16.xpose.msra.mxu0 0
        %484 = vmatprep.subr.bf16.mxu0 0
        %485 = vmatpush1.bf16.xpose.msra.mxu0 0
        %486 = vmatprep.subr.bf16.mxu0 0
        %487 = vmatpush1.bf16.xpose.msra.mxu0 0
        %488 = vmatprep.subr.bf16.mxu0 0
        %489 = vmatpush1.bf16.xpose.msra.mxu0 0
        %490 = vmatprep.mubr.bf16.mxu0 0
        %491 = vmatmul.mubr.bf16.gmra.mrb[0].mxu0 %v453
        %v492 = vpop.f32.mrb[0].mxu0
        %v493 = vadd.f32 0.0, %v492
        %v494 = vpop.f32.mrb[0].mxu0
        %v495 = vpop.f32.mrb[0].mxu0
        %v496 = vpop.f32.mrb[0].mxu0
        %497 = vdwg.mxu0
        %v498 = vsel %vm337, %v493, -inf
        %499 = vmax.xlane.f32.xlu0 %v498
        %v500 = vpop.xlane.xlu0 %499
        %v501 = vsub.f32 %v493, %v500
        %v502 = vmul.f32 %v501, 1.442695
        %v503 = vpow.pop %v502
        %v504 = vsel %vm337, %v503, 0.0
        %505 = vadd.xlane.f32.xlu0 %v504
        %v506 = vpop.xlane.xlu0 %505
        %v507 = vpack.c.bf16 %v503, %v503
        %508 = vrot.lane.b32.xlu0 %v333, 56
        %v509 = vpop.permute.xlu0 %508
        %v511 = vsel %vm337, %v507, 0
        %v514 = vsel %vm399, %v509, 0
        %516 = vmatprep.subr.bf16.mxu0 0
        %517 = vmatpush1.bf16.msra.mxu0 %v514
        %518 = vmatprep.subr.bf16.mxu0 0
        %519 = vmatpush1.bf16.msra.mxu0 0
        %520 = vmatprep.subr.bf16.mxu0 0
        %521 = vmatpush1.bf16.msra.mxu0 0
        %522 = vmatprep.subr.bf16.mxu0 0
        %523 = vmatpush1.bf16.msra.mxu0 0
        %524 = vmatprep.subr.bf16.mxu0 0
        %525 = vmatpush1.bf16.msra.mxu0 0
        %526 = vmatprep.subr.bf16.mxu0 0
        %527 = vmatpush1.bf16.msra.mxu0 0
        %528 = vmatprep.subr.bf16.mxu0 0
        %529 = vmatpush1.bf16.msra.mxu0 0
        %530 = vmatprep.subr.bf16.mxu0 0
        %531 = vmatpush1.bf16.msra.mxu0 0
        %532 = vmatprep.subr.bf16.mxu0 0
        %533 = vmatpush1.bf16.msra.mxu0 0
        %534 = vmatprep.subr.bf16.mxu0 0
        %535 = vmatpush1.bf16.msra.mxu0 0
        %536 = vmatprep.subr.bf16.mxu0 0
        %537 = vmatpush1.bf16.msra.mxu0 0
        %538 = vmatprep.subr.bf16.mxu0 0
        %539 = vmatpush1.bf16.msra.mxu0 0
        %540 = vmatprep.subr.bf16.mxu0 0
        %541 = vmatpush1.bf16.msra.mxu0 0
        %542 = vmatprep.subr.bf16.mxu0 0
        %543 = vmatpush1.bf16.msra.mxu0 0
        %544 = vmatprep.subr.bf16.mxu0 0
        %545 = vmatpush1.bf16.msra.mxu0 0
        %546 = vmatprep.subr.bf16.mxu0 0
        %547 = vmatpush1.bf16.msra.mxu0 0
        %548 = vmatprep.mubr.bf16.mxu0 0
        %549 = vmatmul.mubr.bf16.gmra.mrb[0].mxu0 %v511
        %v550 = vpop.f32.mrb[0].mxu0
        %v551 = vadd.f32 0.0, %v550
        %v552 = vpop.f32.mrb[0].mxu0
        %v553 = vpop.f32.mrb[0].mxu0
        %v554 = vpop.f32.mrb[0].mxu0
        %555 = vdwg.mxu0
        %v556 = vrcp.pop %v506
        %v557 = vmul.f32 %v551, %v556
        %559 = vrot.lane.b32.xlu0 %v557, 8
        %v560 = vpop.permute.xlu0 %559
        %v562 = vadd.f32 %v326, %v560
        %vm563 = vcmask 130112
        %564 = vst.msk [vmem:[#allocation2] sm:$0xff] %vm563, %v562
        %565 = vrot.lane.b32.xlu0 %v332, 112
        %v566 = vpop.permute.xlu0 %565
        %567 = vrot.lane.b32.xlu0 %v333, 80
        %v568 = vpop.permute.xlu0 %567
        %v570 = vsel %vm337, %v566, 0
        %v573 = vsel %vm337, %v568, 0
        %575 = vmatprep.subr.bf16.mxu0 0
        %576 = vmatpush1.bf16.xpose.msra.mxu0 %v573
        %577 = vmatprep.subr.bf16.mxu0 0
        %578 = vmatpush1.bf16.xpose.msra.mxu0 0
        %579 = vmatprep.subr.bf16.mxu0 0
        %580 = vmatpush1.bf16.xpose.msra.mxu0 0
        %581 = vmatprep.subr.bf16.mxu0 0
        %582 = vmatpush1.bf16.xpose.msra.mxu0 0
        %583 = vmatprep.subr.bf16.mxu0 0
        %584 = vmatpush1.bf16.xpose.msra.mxu0 0
        %585 = vmatprep.subr.bf16.mxu0 0
        %586 = vmatpush1.bf16.xpose.msra.mxu0 0
        %587 = vmatprep.subr.bf16.mxu0 0
        %588 = vmatpush1.bf16.xpose.msra.mxu0 0
        %589 = vmatprep.subr.bf16.mxu0 0
        %590 = vmatpush1.bf16.xpose.msra.mxu0 0
        %591 = vmatprep.subr.bf16.mxu0 0
        %592 = vmatpush1.bf16.xpose.msra.mxu0 0
        %593 = vmatprep.subr.bf16.mxu0 0
        %594 = vmatpush1.bf16.xpose.msra.mxu0 0
        %595 = vmatprep.subr.bf16.mxu0 0
        %596 = vmatpush1.bf16.xpose.msra.mxu0 0
        %597 = vmatprep.subr.bf16.mxu0 0
        %598 = vmatpush1.bf16.xpose.msra.mxu0 0
        %599 = vmatprep.subr.bf16.mxu0 0
        %600 = vmatpush1.bf16.xpose.msra.mxu0 0
        %601 = vmatprep.subr.bf16.mxu0 0
        %602 = vmatpush1.bf16.xpose.msra.mxu0 0
        %603 = vmatprep.subr.bf16.mxu0 0
        %604 = vmatpush1.bf16.xpose.msra.mxu0 0
        %605 = vmatprep.subr.bf16.mxu0 0
        %606 = vmatpush1.bf16.xpose.msra.mxu0 0
        %607 = vmatprep.mubr.bf16.mxu0 0
        %608 = vmatmul.mubr.bf16.gmra.mrb[0].mxu0 %v570
        %v609 = vpop.f32.mrb[0].mxu0
        %v610 = vadd.f32 0.0, %v609
        %v611 = vpop.f32.mrb[0].mxu0
        %v612 = vpop.f32.mrb[0].mxu0
        %v613 = vpop.f32.mrb[0].mxu0
        %614 = vdwg.mxu0
        %v615 = vsel %vm337, %v610, -inf
        %616 = vmax.xlane.f32.xlu0 %v615
        %v617 = vpop.xlane.xlu0 %616
        %v618 = vsub.f32 %v610, %v617
        %v619 = vmul.f32 %v618, 1.442695
        %v620 = vpow.pop %v619
        %v621 = vsel %vm337, %v620, 0.0
        %622 = vadd.xlane.f32.xlu0 %v621
        %v623 = vpop.xlane.xlu0 %622
        %v624 = vpack.c.bf16 %v620, %v620
        %625 = vrot.lane.b32.xlu0 %v333, 48
        %v626 = vpop.permute.xlu0 %625
        %v628 = vsel %vm337, %v624, 0
        %v631 = vsel %vm399, %v626, 0
        %633 = vmatprep.subr.bf16.mxu0 0
        %634 = vmatpush1.bf16.msra.mxu0 %v631
        %635 = vmatprep.subr.bf16.mxu0 0
        %636 = vmatpush1.bf16.msra.mxu0 0
        %637 = vmatprep.subr.bf16.mxu0 0
        %638 = vmatpush1.bf16.msra.mxu0 0
        %639 = vmatprep.subr.bf16.mxu0 0
        %640 = vmatpush1.bf16.msra.mxu0 0
        %641 = vmatprep.subr.bf16.mxu0 0
        %642 = vmatpush1.bf16.msra.mxu0 0
        %643 = vmatprep.subr.bf16.mxu0 0
        %644 = vmatpush1.bf16.msra.mxu0 0
        %645 = vmatprep.subr.bf16.mxu0 0
        %646 = vmatpush1.bf16.msra.mxu0 0
        %647 = vmatprep.subr.bf16.mxu0 0
        %648 = vmatpush1.bf16.msra.mxu0 0
        %649 = vmatprep.subr.bf16.mxu0 0
        %650 = vmatpush1.bf16.msra.mxu0 0
        %651 = vmatprep.subr.bf16.mxu0 0
        %652 = vmatpush1.bf16.msra.mxu0 0
        %653 = vmatprep.subr.bf16.mxu0 0
        %654 = vmatpush1.bf16.msra.mxu0 0
        %655 = vmatprep.subr.bf16.mxu0 0
        %656 = vmatpush1.bf16.msra.mxu0 0
        %657 = vmatprep.subr.bf16.mxu0 0
        %658 = vmatpush1.bf16.msra.mxu0 0
        %659 = vmatprep.subr.bf16.mxu0 0
        %660 = vmatpush1.bf16.msra.mxu0 0
        %661 = vmatprep.subr.bf16.mxu0 0
        %662 = vmatpush1.bf16.msra.mxu0 0
        %663 = vmatprep.subr.bf16.mxu0 0
        %664 = vmatpush1.bf16.msra.mxu0 0
        %665 = vmatprep.mubr.bf16.mxu0 0
        %666 = vmatmul.mubr.bf16.gmra.mrb[0].mxu0 %v628
        %v667 = vpop.f32.mrb[0].mxu0
        %v668 = vadd.f32 0.0, %v667
        %v669 = vpop.f32.mrb[0].mxu0
        %v670 = vpop.f32.mrb[0].mxu0
        %v671 = vpop.f32.mrb[0].mxu0
        %672 = vdwg.mxu0
        %v673 = vrcp.pop %v623
        %v674 = vmul.f32 %v668, %v673
        %676 = vrot.lane.b32.xlu0 %v674, 16
        %v677 = vpop.permute.xlu0 %676
        %v679 = vadd.f32 %v326, %v677
        %vm680 = vcmask 195712
        %681 = vst.msk [vmem:[#allocation2] sm:$0xff] %vm680, %v679
        %682 = vrot.lane.b32.xlu0 %v332, 104
        %v683 = vpop.permute.xlu0 %682
        %684 = vrot.lane.b32.xlu0 %v333, 72
        %v685 = vpop.permute.xlu0 %684
        %v687 = vsel %vm337, %v683, 0
        %v690 = vsel %vm337, %v685, 0
        %692 = vmatprep.subr.bf16.mxu0 0
        %693 = vmatpush1.bf16.xpose.msra.mxu0 %v690
        %694 = vmatprep.subr.bf16.mxu0 0
        %695 = vmatpush1.bf16.xpose.msra.mxu0 0
        %696 = vmatprep.subr.bf16.mxu0 0
        %697 = vmatpush1.bf16.xpose.msra.mxu0 0
        %698 = vmatprep.subr.bf16.mxu0 0
        %699 = vmatpush1.bf16.xpose.msra.mxu0 0
        %700 = vmatprep.subr.bf16.mxu0 0
        %701 = vmatpush1.bf16.xpose.msra.mxu0 0
        %702 = vmatprep.subr.bf16.mxu0 0
        %703 = vmatpush1.bf16.xpose.msra.mxu0 0
        %704 = vmatprep.subr.bf16.mxu0 0
        %705 = vmatpush1.bf16.xpose.msra.mxu0 0
        %706 = vmatprep.subr.bf16.mxu0 0
        %707 = vmatpush1.bf16.xpose.msra.mxu0 0
        %708 = vmatprep.subr.bf16.mxu0 0
        %709 = vmatpush1.bf16.xpose.msra.mxu0 0
        %710 = vmatprep.subr.bf16.mxu0 0
        %711 = vmatpush1.bf16.xpose.msra.mxu0 0
        %712 = vmatprep.subr.bf16.mxu0 0
        %713 = vmatpush1.bf16.xpose.msra.mxu0 0
        %714 = vmatprep.subr.bf16.mxu0 0
        %715 = vmatpush1.bf16.xpose.msra.mxu0 0
        %716 = vmatprep.subr.bf16.mxu0 0
        %717 = vmatpush1.bf16.xpose.msra.mxu0 0
        %718 = vmatprep.subr.bf16.mxu0 0
        %719 = vmatpush1.bf16.xpose.msra.mxu0 0
        %720 = vmatprep.subr.bf16.mxu0 0
        %721 = vmatpush1.bf16.xpose.msra.mxu0 0
        %722 = vmatprep.subr.bf16.mxu0 0
        %723 = vmatpush1.bf16.xpose.msra.mxu0 0
        %724 = vmatprep.mubr.bf16.mxu0 0
        %725 = vmatmul.mubr.bf16.gmra.mrb[0].mxu0 %v687
        %v726 = vpop.f32.mrb[0].mxu0
        %v727 = vadd.f32 0.0, %v726
        %v728 = vpop.f32.mrb[0].mxu0
        %v729 = vpop.f32.mrb[0].mxu0
        %v730 = vpop.f32.mrb[0].mxu0
        %731 = vdwg.mxu0
        %v732 = vsel %vm337, %v727, -inf
        %733 = vmax.xlane.f32.xlu0 %v732
        %v734 = vpop.xlane.xlu0 %733
        %v735 = vsub.f32 %v727, %v734
        %v736 = vmul.f32 %v735, 1.442695
        %v737 = vpow.pop %v736
        %v738 = vsel %vm337, %v737, 0.0
        %739 = vadd.xlane.f32.xlu0 %v738
        %v740 = vpop.xlane.xlu0 %739
        %v741 = vpack.c.bf16 %v737, %v737
        %742 = vrot.lane.b32.xlu0 %v333, 40
        %v743 = vpop.permute.xlu0 %742
        %v745 = vsel %vm337, %v741, 0
        %v748 = vsel %vm399, %v743, 0
        %750 = vmatprep.subr.bf16.mxu0 0
        %751 = vmatpush1.bf16.msra.mxu0 %v748
        %752 = vmatprep.subr.bf16.mxu0 0
        %753 = vmatpush1.bf16.msra.mxu0 0
        %754 = vmatprep.subr.bf16.mxu0 0
        %755 = vmatpush1.bf16.msra.mxu0 0
        %756 = vmatprep.subr.bf16.mxu0 0
        %757 = vmatpush1.bf16.msra.mxu0 0
        %758 = vmatprep.subr.bf16.mxu0 0
        %759 = vmatpush1.bf16.msra.mxu0 0
        %760 = vmatprep.subr.bf16.mxu0 0
        %761 = vmatpush1.bf16.msra.mxu0 0
        %762 = vmatprep.subr.bf16.mxu0 0
        %763 = vmatpush1.bf16.msra.mxu0 0
        %764 = vmatprep.subr.bf16.mxu0 0
        %765 = vmatpush1.bf16.msra.mxu0 0
        %766 = vmatprep.subr.bf16.mxu0 0
        %767 = vmatpush1.bf16.msra.mxu0 0
        %768 = vmatprep.subr.bf16.mxu0 0
        %769 = vmatpush1.bf16.msra.mxu0 0
        %770 = vmatprep.subr.bf16.mxu0 0
        %771 = vmatpush1.bf16.msra.mxu0 0
        %772 = vmatprep.subr.bf16.mxu0 0
        %773 = vmatpush1.bf16.msra.mxu0 0
        %774 = vmatprep.subr.bf16.mxu0 0
        %775 = vmatpush1.bf16.msra.mxu0 0
        %776 = vmatprep.subr.bf16.mxu0 0
        %777 = vmatpush1.bf16.msra.mxu0 0
        %778 = vmatprep.subr.bf16.mxu0 0
        %779 = vmatpush1.bf16.msra.mxu0 0
        %780 = vmatprep.subr.bf16.mxu0 0
        %781 = vmatpush1.bf16.msra.mxu0 0
        %782 = vmatprep.mubr.bf16.mxu0 0
        %783 = vmatmul.mubr.bf16.gmra.mrb[0].mxu0 %v745
        %v784 = vpop.f32.mrb[0].mxu0
        %v785 = vadd.f32 0.0, %v784
        %v786 = vpop.f32.mrb[0].mxu0
        %v787 = vpop.f32.mrb[0].mxu0
        %v788 = vpop.f32.mrb[0].mxu0
        %789 = vdwg.mxu0
        %v790 = vrcp.pop %v740
        %v791 = vmul.f32 %v785, %v790
        %793 = vrot.lane.b32.xlu0 %v791, 24
        %v794 = vpop.permute.xlu0 %793
        %v796 = vadd.f32 %v326, %v794
        %vm797 = vcmask 261312
        %798 = vst.msk [vmem:[#allocation2] sm:$0xff] %vm797, %v796
        %v799 = vld [vmem:[#allocation2] sm:$0xff]
        %v800 = vpack.c.bf16 %v799, %v799
        %v801 = vld [vmem:[#allocation8] sm:$0xf]
        %v802 = vld [vmem:[#allocation8 + $0x4] sm:$0xf]
        %v803 = vld [vmem:[#allocation8 + $0x8] sm:$0xf]
        %v804 = vld [vmem:[#allocation8 + $0xc] sm:$0xf]
        %v805 = vld [vmem:[%s4] sm:$0x1]
        %v807 = vlaneseq
        %v808 = vshrl.u32 %v807, 7
        %v809 = vsub.s32 0, %v808
        %v810 = vrot.slane %v805, %v809
        %v816 = vunpack.c.l.b16 %v801
        %v817 = vunpack.c.l.b16 %v802
        %v818 = vunpack.c.l.b16 %v803
        %v819 = vunpack.c.l.b16 %v804
        %v820 = vpack.c.b16 %v817, %v816
        %v821 = vpack.c.b16 %v819, %v818
        %vm824 = vcmask 261120
        %v826 = vsel %vm824, %v800, 0
        %828 = vmatprep.subr.bf16.mxu0 0
        %829 = vmatpush1.bf16.msra.mxu0 %v820
        %830 = vmatprep.subr.bf16.mxu0 0
        %831 = vmatpush1.bf16.msra.mxu0 %v821
        %832 = vmatprep.subr.bf16.mxu0 0
        %833 = vmatpush1.bf16.msra.mxu0 0
        %834 = vmatprep.subr.bf16.mxu0 0
        %835 = vmatpush1.bf16.msra.mxu0 0
        %836 = vmatprep.subr.bf16.mxu0 0
        %837 = vmatpush1.bf16.msra.mxu0 0
        %838 = vmatprep.subr.bf16.mxu0 0
        %839 = vmatpush1.bf16.msra.mxu0 0
        %840 = vmatprep.subr.bf16.mxu0 0
        %841 = vmatpush1.bf16.msra.mxu0 0
        %842 = vmatprep.subr.bf16.mxu0 0
        %843 = vmatpush1.bf16.msra.mxu0 0
        %844 = vmatprep.subr.bf16.mxu0 0
        %845 = vmatpush1.bf16.msra.mxu0 0
        %846 = vmatprep.subr.bf16.mxu0 0
        %847 = vmatpush1.bf16.msra.mxu0 0
        %848 = vmatprep.subr.bf16.mxu0 0
        %849 = vmatpush1.bf16.msra.mxu0 0
        %850 = vmatprep.subr.bf16.mxu0 0
        %851 = vmatpush1.bf16.msra.mxu0 0
        %852 = vmatprep.subr.bf16.mxu0 0
        %853 = vmatpush1.bf16.msra.mxu0 0
        %854 = vmatprep.subr.bf16.mxu0 0
        %855 = vmatpush1.bf16.msra.mxu0 0
        %856 = vmatprep.subr.bf16.mxu0 0
        %857 = vmatpush1.bf16.msra.mxu0 0
        %858 = vmatprep.subr.bf16.mxu0 0
        %859 = vmatpush1.bf16.msra.mxu0 0
        %860 = vmatprep.mubr.bf16.mxu0 0
        %861 = vmatmul.mubr.bf16.gmra.mrb[0].mxu0 %v826
        %v862 = vpop.f32.mrb[0].mxu0
        %v863 = vadd.f32 %v810, %v862
        %v864 = vpop.f32.mrb[0].mxu0
        %v865 = vpop.f32.mrb[0].mxu0
        %v866 = vpop.f32.mrb[0].mxu0
        %867 = vdwg.mxu0
        %v868 = vmax.f32 %v863, 0.0
        %v869 = vadd.f32 %v799, %v868
        %870 = vst.msk [vmem:[%s268] sm:$0xff] %vm824, %v869
        %s871 = sand.u32 %s141, 1
        %s872 = scalar_lea.sflag [#allocation5], %s871
        %s873 = sand.u32 %s141, 1
        %s874 = smul.addr %s873, 8
        %s875 = scalar_lea.vmem [#allocation9], %s874
        // Predicated region
        $region53: #{tpu_custom_call.1} parent=39 // pred_check
          %p876 = pneg %p151
        $region54: #{tpu_custom_call.1} parent=39 // pred_check_branch
          %878 = sbr.rel (%p876) target = $region56
        $region55: #{tpu_custom_call.1} parent=39 // pred_region
          %s880 = ssub.s32 128, 128
          %881 = vsyncadd %s872, %s880
          %s882 = smul.addr %s23, 128
          %s883 = scalar_lea.hbm %s5, %s882
          %s885 = sshll.u32 %s875, 4
          %s886 = int_to_ptr.vmem [resolvable:$true] %s885
          %888 = dma.vmem_to_hbm [thread:$0]  %s886, 128, %s883, %s872
        $region56: #{tpu_custom_call.1} parent=39 // pred_fallthru
          _
      $region40: #{tpu_custom_call.1} parent=5 // pred_fallthru
        _
      %p889 = scmp.le.s32.totalorder 2, %s18
      // Predicated region
      $region57: #{tpu_custom_call.1} parent=5 // pred_check
        %p890 = pneg %p889
      $region58: #{tpu_custom_call.1} parent=5 // pred_check_branch
        %892 = sbr.rel (%p890) target = $region60
      $region59: #{tpu_custom_call.1} parent=5 // pred_region
        %s893 = ssub.s32 %s18, 2
        // Predicated region
        $region61: #{tpu_custom_call.1} parent=59 // pred_check
          %p894 = pneg %p157
        $region62: #{tpu_custom_call.1} parent=59 // pred_check_branch
          %896 = sbr.rel (%p894) target = $region64
        $region63: #{tpu_custom_call.1} parent=59 // pred_region
          %s897 = sand.u32 %s142, 1
          %s898 = scalar_lea.sflag [#allocation5], %s897
          %s899 = sand.u32 %s142, 1
          %s900 = smul.addr %s899, 8
          %s901 = scalar_lea.vmem [#allocation9], %s900
          %902 = dma.done %s898, 128
        $region64: #{tpu_custom_call.1} parent=59 // pred_fallthru
          _
      $region60: #{tpu_custom_call.1} parent=5 // pred_fallthru
        _
    $region6: #{tpu_custom_call.1} parent=1 // loop_footer
      %s22 = sadd.s32 1, %s18
    $region7: #{tpu_custom_call.1} parent=1 // loop_footer_branch
      %17 = sbr.rel target = $region3
    $region8: #{tpu_custom_call.1} parent=1 // loop_exit
      _
    %903 = vsyncpa [#allocation4], 1
    %s904 = scalar_lea.sflag [#allocation4], 1
    %905 = vsyncpa %s904, 1
    %906 = vsyncpa [#allocation7], 1
    %907 = vsyncpa [#allocation5], 1
    %s908 = scalar_lea.sflag [#allocation5], 1
    %909 = vsyncpa %s908, 1

</llo_original>
